<compile_context>
chip_gen: v7x
topology: tpu7x:2x2x1
jax: 0.10.0
libtpu: 0.0.40
codegen_flags: <defaults>
</compile_context>

<pallas_src>
import jax
import jax.numpy as jnp
from jax.experimental import pallas as pl
from jax.experimental.pallas import tpu as pltpu

# ProgramParams.LEARNING_RATE stand-in (external constant in the original code).
LEARNING_RATE = 1e-3


def _round_up(x: int, m: int) -> int:
    return ((x + m - 1) // m) * m


def _vmem_budget_bytes():
    """Return (double-buffered input budget, vmem_limit_bytes) per generation."""
    try:
        cap = pltpu.get_tpu_info().vmem_capacity_bytes
    except Exception:
        cap = 64 << 20                       # conservative: assume v7x-class part
    if cap <= (64 << 20):                    # v7x: 64 MiB physical VMEM
        return 32 << 20, 48 << 20
    # v5e / v6e: 128 MiB physical; explicit limit overrides the small scoped default.
    return 20 << 20, 40 << 20


def _make_kernel(true_t: int, tile_t: int, need_t_mask: bool, lr: float):
    def kernel(main_ref, target_ref, discount_ref, reward_ref, out_ref):
        t = pl.program_id(1)

        @pl.when(t == 0)
        def _():
            out_ref[...] = jnp.zeros_like(out_ref)

        # Load in native (possibly bf16) dtype, compute in f32.
        td = (main_ref[...].astype(jnp.float32)
              - reward_ref[...].astype(jnp.float32)
              + discount_ref[...].astype(jnp.float32)
              * target_ref[...].astype(jnp.float32))
        if need_t_mask:
            # Ragged last T chunk: rows beyond the true T hold undefined data.
            row = jax.lax.broadcasted_iota(jnp.int32, td.shape, 0)
            td = jnp.where(t * tile_t + row < true_t, td, 0.0)
        out_ref[...] += jnp.sum(td * td, axis=0, keepdims=True)

        @pl.when(t == pl.num_programs(1) - 1)
        def _():
            out_ref[...] = lr * out_ref[...]

    return kernel


def temporal_difference_loss(main_value, target_value, discount_value, reward,
                             *, tile_n=None, tile_t=None):
    """All inputs: [T, B, D] arrays (any float dtype). Returns float32 [B, D].

    tile_n / tile_t are test-only overrides (tile_t must be a multiple of 8
    when it does not equal T).
    """
    T, B, D = main_value.shape
    if T == 0:
        # PyTorch: empty list -> LEARNING_RATE * 0 (scalar), consistent with
        # temporal_difference_loss_from_list.
        return jnp.float32(0.0)

    N = B * D
    # Contiguous reshape only — no pad, no dtype cast, no extra HBM round trip.
    streams = [x.reshape(T, N) for x in
               (main_value, target_value, discount_value, reward)]
    itemsize = max(jnp.dtype(x.dtype).itemsize for x in streams)

    input_budget, vmem_limit = _vmem_budget_bytes()

    # ---- lane (N) tiling: multiple of 128, capped at 2048 -------------------
    n128 = _round_up(N, 128)
    TN = tile_n if tile_n is not None else min(n128, 2048)

    def _pick_tt(tn):
        bytes_per_t_row = 4 * 2 * tn * itemsize      # 4 streams, double-buffered
        tt_max = max(16, input_budget // bytes_per_t_row)
        if T <= tt_max:
            return T                                 # full T: block dim == array dim
        return (tt_max // 16) * 16                   # sublane-aligned chunk

    TT = tile_t if tile_t is not None else _pick_tt(TN)
    grid_t = pl.cdiv(T, TT)
    grid_n = pl.cdiv(N, TN)

    # v7x: if T is chunked but N is a single tile, split N so both TensorCores
    # get work on the leading "parallel" axis (neutral on v5e/v6e).
    if tile_n is None and grid_t > 1 and grid_n < 2 and TN > 128:
        TN = _round_up(pl.cdiv(n128, 2), 128)
        TT = tile_t if tile_t is not None else _pick_tt(TN)
        grid_t = pl.cdiv(T, TT)
        grid_n = pl.cdiv(N, TN)

    need_t_mask = (T % TT) != 0

    in_spec = pl.BlockSpec((TT, TN), lambda n, t: (t, n))
    out_spec = pl.BlockSpec((1, TN), lambda n, t: (0, n))

    out_flat = pl.pallas_call(
        _make_kernel(T, TT, need_t_mask, LEARNING_RATE),
        out_shape=jax.ShapeDtypeStruct((1, N), jnp.float32),
        grid_spec=pltpu.PrefetchScalarGridSpec(
            num_scalar_prefetch=0,
            grid=(grid_n, grid_t),
            in_specs=[in_spec, in_spec, in_spec, in_spec],
            out_specs=out_spec,
        ),
        compiler_params=pltpu.CompilerParams(
            dimension_semantics=("parallel", "arbitrary"),
            vmem_limit_bytes=vmem_limit),
    )(*streams)

    return out_flat[0].reshape(B, D)


def temporal_difference_loss_from_list(td_values):
    """Mirror of the PyTorch forward: list of dicts of [B, D] arrays.

    NOTE(perf): with a Python list input, the jnp.stack (a full HBM read+write
    of every stream) dominates this bandwidth-bound kernel.  Producers that
    already hold stacked [T, B, D] tensors should call
    temporal_difference_loss directly.
    """
    if len(td_values) == 0:
        return jnp.float32(0.0)          # matches PyTorch: LEARNING_RATE * 0
    main = jnp.stack([x["main_value"] for x in td_values])
    target = jnp.stack([x["target_value"] for x in td_values])
    discount = jnp.stack([x["discount_value"] for x in td_values])
    reward = jnp.stack([x["reward"] for x in td_values])
    return temporal_difference_loss(main, target, discount, reward)


def _reference(main, target, discount, reward):
    main, target, discount, reward = (
        x.astype(jnp.float32) for x in (main, target, discount, reward))
    td = main - reward + discount * target
    return LEARNING_RATE * jnp.sum(td * td, axis=0)


if __name__ == "__main__":
    key = jax.random.PRNGKey(0)

    # ---- demo shape matching the module: seq=8 TD entries, batch=4, dim=32
    T, B, D = 8, 4, 32
    k0, k1, k2, k3, key = jax.random.split(key, 5)
    main_value = jax.random.normal(k0, (T, B, D), dtype=jnp.float32)
    target_value = jax.random.normal(k1, (T, B, D), dtype=jnp.float32)
    discount_value = jax.random.uniform(k2, (T, B, D), dtype=jnp.float32)
    reward = jax.random.normal(k3, (T, B, D), dtype=jnp.float32)

    td_values = [
        {"main_value": main_value[t], "target_value": target_value[t],
         "discount_value": discount_value[t], "reward": reward[t]}
        for t in range(T)
    ]
    out = jax.block_until_ready(temporal_difference_loss_from_list(td_values))
    ref = _reference(main_value, target_value, discount_value, reward)
    assert out.shape == (B, D)
    assert jnp.allclose(out, ref, rtol=1e-5, atol=1e-6), "mismatch vs reference"

    # ---- ragged lane dim (N=150): no wrapper padding, tail lanes never written
    T2, B2, D2 = 5, 3, 50
    k0, k1, k2, k3, key = jax.random.split(key, 5)
    m2 = jax.random.normal(k0, (T2, B2, D2), dtype=jnp.float32)
    t2 = jax.random.normal(k1, (T2, B2, D2), dtype=jnp.float32)
    d2 = jax.random.uniform(k2, (T2, B2, D2), dtype=jnp.float32)
    r2 = jax.random.normal(k3, (T2, B2, D2), dtype=jnp.float32)
    out2 = jax.block_until_ready(temporal_difference_loss(m2, t2, d2, r2))
    assert out2.shape == (B2, D2)
    assert jnp.allclose(out2, _reference(m2, t2, d2, r2), rtol=1e-5, atol=1e-6), \
        "mismatch (ragged N)"

    # ---- ragged T chunking + in-kernel row mask (tile_t override for test)
    T3, B3, D3 = 13, 2, 64
    k0, k1, k2, k3, key = jax.random.split(key, 5)
    m3 = jax.random.normal(k0, (T3, B3, D3), dtype=jnp.float32)
    t3 = jax.random.normal(k1, (T3, B3, D3), dtype=jnp.float32)
    d3 = jax.random.uniform(k2, (T3, B3, D3), dtype=jnp.float32)
    r3 = jax.random.normal(k3, (T3, B3, D3), dtype=jnp.float32)
    out3 = jax.block_until_ready(
        temporal_difference_loss(m3, t3, d3, r3, tile_t=8))
    assert jnp.allclose(out3, _reference(m3, t3, d3, r3), rtol=1e-5, atol=1e-6), \
        "mismatch (ragged T mask)"

    # ---- bf16 inputs stay narrow in HBM; cast to f32 inside the kernel
    m4, t4, d4, r4 = (x.astype(jnp.bfloat16)
                      for x in (main_value, target_value, discount_value, reward))
    out4 = jax.block_until_ready(temporal_difference_loss(m4, t4, d4, r4))
    ref4 = _reference(m4, t4, d4, r4)
    assert jnp.allclose(out4, ref4, rtol=1e-4, atol=1e-5), "mismatch (bf16)"

    # ---- empty list matches PyTorch's scalar 0
    assert float(temporal_difference_loss_from_list([])) == 0.0

    print("KERNEL_OK")
</pallas_src>

<mosaic_0001>
module attributes {stable_mosaic.version = 11 : i64} {
  func.func @kernel(%arg0: i32, %arg1: i32, %arg2: memref<8x128xf32, #tpu.memory_space<vmem>>, %arg3: memref<8x128xf32, #tpu.memory_space<vmem>>, %arg4: memref<8x128xf32, #tpu.memory_space<vmem>>, %arg5: memref<8x128xf32, #tpu.memory_space<vmem>>, %arg6: memref<1x128xf32, #tpu.memory_space<vmem>>) attributes {dimension_semantics = [#tpu.dimension_semantics<parallel>, #tpu.dimension_semantics<arbitrary>], iteration_bounds = array<i64: 1, 1>, scalar_prefetch = 0 : i64, scratch_operands = 0 : i64, tpu.core_type = #tpu.core_type<tc>, window_params = [{transform_indices = @transform_0, window_bounds = array<i64: 8, 128>}, {transform_indices = @transform_1, window_bounds = array<i64: 8, 128>}, {transform_indices = @transform_2, window_bounds = array<i64: 8, 128>}, {transform_indices = @transform_3, window_bounds = array<i64: 8, 128>}, {transform_indices = @transform_4, window_bounds = array<i64: 1, 128>}]} {
    %c0_i32 = arith.constant 0 : i32
    %0 = arith.cmpi eq, %arg1, %c0_i32 : i32
    %1 = arith.extui %0 : i1 to i32
    %c0_i32_0 = arith.constant 0 : i32
    %2 = arith.cmpi ne, %1, %c0_i32_0 : i32
    scf.if %2 {
      %cst_14 = arith.constant 0.000000e+00 : f32
      %19 = vector.broadcast %cst_14 : f32 to vector<1x128xf32>
      %c0_15 = arith.constant 0 : index
      %c0_16 = arith.constant 0 : index
      %20 = vector.load %arg6[%c0_15, %c0_16] : memref<1x128xf32, #tpu.memory_space<vmem>>, vector<1x128xf32>
      tpu.vector_store %arg6[%c0_15, %c0_16], %19 {strides = array<i32>} : memref<1x128xf32, #tpu.memory_space<vmem>>, vector<1x128xf32>,
    } else {
    }
    %c0 = arith.constant 0 : index
    %c0_1 = arith.constant 0 : index
    %3 = vector.load %arg2[%c0, %c0_1] : memref<8x128xf32, #tpu.memory_space<vmem>>, vector<8x128xf32>
    %c0_2 = arith.constant 0 : index
    %c0_3 = arith.constant 0 : index
    %4 = vector.load %arg5[%c0_2, %c0_3] : memref<8x128xf32, #tpu.memory_space<vmem>>, vector<8x128xf32>
    %5 = arith.subf %3, %4 : vector<8x128xf32>
    %c0_4 = arith.constant 0 : index
    %c0_5 = arith.constant 0 : index
    %6 = vector.load %arg4[%c0_4, %c0_5] : memref<8x128xf32, #tpu.memory_space<vmem>>, vector<8x128xf32>
    %c0_6 = arith.constant 0 : index
    %c0_7 = arith.constant 0 : index
    %7 = vector.load %arg3[%c0_6, %c0_7] : memref<8x128xf32, #tpu.memory_space<vmem>>, vector<8x128xf32>
    %8 = arith.mulf %6, %7 : vector<8x128xf32>
    %9 = arith.addf %5, %8 : vector<8x128xf32>
    %c0_8 = arith.constant 0 : index
    %c0_9 = arith.constant 0 : index
    %10 = vector.load %arg6[%c0_8, %c0_9] : memref<1x128xf32, #tpu.memory_space<vmem>>, vector<1x128xf32>
    %11 = arith.mulf %9, %9 : vector<8x128xf32>
    %cst = arith.constant dense<0.000000e+00> : vector<128xf32>
    %12 = vector.multi_reduction <add>, %11, %cst [0] : vector<8x128xf32> to vector<128xf32>
    %13 = vector.shape_cast %12 : vector<128xf32> to vector<1x128xf32>
    %14 = arith.addf %10, %13 : vector<1x128xf32>
    %c0_10 = arith.constant 0 : index
    %c0_11 = arith.constant 0 : index
    %15 = vector.load %arg6[%c0_10, %c0_11] : memref<1x128xf32, #tpu.memory_space<vmem>>, vector<1x128xf32>
    tpu.vector_store %arg6[%c0_10, %c0_11], %14 {strides = array<i32>} : memref<1x128xf32, #tpu.memory_space<vmem>>, vector<1x128xf32>,
    %c0_i32_12 = arith.constant 0 : i32
    %16 = arith.cmpi eq, %arg1, %c0_i32_12 : i32
    %17 = arith.extui %16 : i1 to i32
    %c0_i32_13 = arith.constant 0 : i32
    %18 = arith.cmpi ne, %17, %c0_i32_13 : i32
    scf.if %18 {
      %c0_14 = arith.constant 0 : index
      %c0_15 = arith.constant 0 : index
      %19 = vector.load %arg6[%c0_14, %c0_15] : memref<1x128xf32, #tpu.memory_space<vmem>>, vector<1x128xf32>
      %cst_16 = arith.constant 1.000000e-03 : f32
      %20 = vector.broadcast %cst_16 : f32 to vector<1x128xf32>
      %21 = arith.mulf %20, %19 : vector<1x128xf32>
      %c0_17 = arith.constant 0 : index
      %c0_18 = arith.constant 0 : index
      %22 = vector.load %arg6[%c0_17, %c0_18] : memref<1x128xf32, #tpu.memory_space<vmem>>, vector<1x128xf32>
      tpu.vector_store %arg6[%c0_17, %c0_18], %21 {strides = array<i32>} : memref<1x128xf32, #tpu.memory_space<vmem>>, vector<1x128xf32>,
    } else {
    }
    return
  }
  func.func @transform_0(%arg0: i32, %arg1: i32) -> (i32, i32) {
    %c0_i32 = arith.constant 0 : i32
    return %arg1, %arg0 : i32, i32
  }
  func.func @transform_1(%arg0: i32, %arg1: i32) -> (i32, i32) {
    %c0_i32 = arith.constant 0 : i32
    return %arg1, %arg0 : i32, i32
  }
  func.func @transform_2(%arg0: i32, %arg1: i32) -> (i32, i32) {
    %c0_i32 = arith.constant 0 : i32
    return %arg1, %arg0 : i32, i32
  }
  func.func @transform_3(%arg0: i32, %arg1: i32) -> (i32, i32) {
    %c0_i32 = arith.constant 0 : i32
    return %arg1, %arg0 : i32, i32
  }
  func.func @transform_4(%arg0: i32, %arg1: i32) -> (i32, i32) {
    %c0_i32 = arith.constant 0 : i32
    %c0_i32_0 = arith.constant 0 : i32
    return %c0_i32, %arg0 : i32, i32
  }
}

</mosaic_0001>

<llo_original>
// kernel: tpu_custom_call.1
$region0: #{tpu_custom_call.1}
  #allocation0 [shape = 'u32[]', space=smem, size = 0x4, offset = 0x4, fixed_abs, tag = 'smem constant byte address 0x4 - core index']
  #allocation1 [shape = 'u32[144,128]{1,0:T(1,128)}', space=vmem, size = 0x12000, scoped, tag = 'internal scratch']
  %s0 = inlined_call_operand.hbm [shape: f32[8,128], index: 0, kind: input, shape index: {}]
  %s1 = inlined_call_operand.hbm [shape: f32[8,128], index: 1, kind: input, shape index: {}]
  %s2 = inlined_call_operand.hbm [shape: f32[8,128], index: 2, kind: input, shape index: {}]
  %s3 = inlined_call_operand.vmem [shape: f32[8,128], index: 3, kind: input, shape index: {}]
  %s4 = inlined_call_operand.hbm [shape: f32[1,128], index: 4, kind: output, shape index: {}]
  %s5 = sld [smem:[#allocation0]]
  $region46: #{tpu_custom_call.1} parent=0
    _
  %s7 = ssub.s32 1, %s5
  %s8 = scalar_select 0, %s7, %s5
  $region1: #{tpu_custom_call.1} parent=0
    #allocation2 [shape = 'u8[4096]{0}', space=vmem, size = 0x1000, scoped, tag = 'input window, operand 0, single buffered']
    #allocation3 [shape = 's32[1]{0}', space=sflag, size = 0x4, scoped, tag = 'scoped memory for tpu_custom_call.1']
    #allocation4 [shape = 's32[1]{0}', space=sflag, size = 0x4, scoped, tag = 'scoped memory for tpu_custom_call.1']
    #allocation5 [shape = 'u8[4096]{0}', space=vmem, size = 0x1000, scoped, tag = 'input window, operand 1, single buffered']
    #allocation6 [shape = 's32[1]{0}', space=sflag, size = 0x4, scoped, tag = 'scoped memory for tpu_custom_call.1']
    #allocation7 [shape = 'u8[4096]{0}', space=vmem, size = 0x1000, scoped, tag = 'input window, operand 2, single buffered']
    #allocation8 [shape = 'u8[512]{0}', space=vmem, size = 0x400, scoped, tag = 'output window, operand 0, single buffered']
    %9 = vsyncpa [#allocation3], 0
    %10 = vsyncpa [#allocation6], 0
    %11 = vsyncpa [#allocation4], 0
    // Predicated region
    $region2: #{tpu_custom_call.1} parent=1 // pred_check
      _
    $region3: #{tpu_custom_call.1} parent=1 // pred_check_branch
      %13 = sbr.rel (0) target = $region5
    $region4: #{tpu_custom_call.1} parent=1 // pred_region
      %s15 = ssub.s32 128, 128
      %16 = vsyncadd [#allocation3], %s15
      %s18 = sshll.u32 [#allocation2], 4
      %s19 = int_to_ptr.vmem [resolvable:$true] %s18
      %21 = dma.hbm_to_vmem [thread:$0]  %s0, 128, %s19, [#allocation3]
    $region5: #{tpu_custom_call.1} parent=1 // pred_fallthru
      _
    // Predicated region
    $region6: #{tpu_custom_call.1} parent=1 // pred_check
      _
    $region7: #{tpu_custom_call.1} parent=1 // pred_check_branch
      %23 = sbr.rel (0) target = $region9
    $region8: #{tpu_custom_call.1} parent=1 // pred_region
      %s25 = ssub.s32 128, 128
      %26 = vsyncadd [#allocation6], %s25
      %s28 = sshll.u32 [#allocation5], 4
      %s29 = int_to_ptr.vmem [resolvable:$true] %s28
      %31 = dma.hbm_to_vmem [thread:$0]  %s1, 128, %s29, [#allocation6]
    $region9: #{tpu_custom_call.1} parent=1 // pred_fallthru
      _
    // Predicated region
    $region10: #{tpu_custom_call.1} parent=1 // pred_check
      _
    $region11: #{tpu_custom_call.1} parent=1 // pred_check_branch
      %33 = sbr.rel (0) target = $region13
    $region12: #{tpu_custom_call.1} parent=1 // pred_region
      %s35 = ssub.s32 128, 128
      %36 = vsyncadd [#allocation6], %s35
      %s38 = sshll.u32 [#allocation7], 4
      %s39 = int_to_ptr.vmem [resolvable:$true] %s38
      %41 = dma.hbm_to_vmem [thread:$0]  %s2, 128, %s39, [#allocation6]
    $region13: #{tpu_custom_call.1} parent=1 // pred_fallthru
      _
    // Predicated region
    $region14: #{tpu_custom_call.1} parent=1 // pred_check
      _
    $region15: #{tpu_custom_call.1} parent=1 // pred_check_branch
      %43 = sbr.rel (0) target = $region17
    $region16: #{tpu_custom_call.1} parent=1 // pred_region
      _
    $region17: #{tpu_custom_call.1} parent=1 // pred_fallthru
      _
    // Predicated region
    $region18: #{tpu_custom_call.1} parent=1 // pred_check
      _
    $region19: #{tpu_custom_call.1} parent=1 // pred_check_branch
      %45 = sbr.rel (0) target = $region21
    $region20: #{tpu_custom_call.1} parent=1 // pred_region
      %46 = dma.done [#allocation3], 128
    $region21: #{tpu_custom_call.1} parent=1 // pred_fallthru
      _
    // Predicated region
    $region22: #{tpu_custom_call.1} parent=1 // pred_check
      _
    $region23: #{tpu_custom_call.1} parent=1 // pred_check_branch
      %48 = sbr.rel (0) target = $region25
    $region24: #{tpu_custom_call.1} parent=1 // pred_region
      %49 = dma.done [#allocation6], 128
    $region25: #{tpu_custom_call.1} parent=1 // pred_fallthru
      _
    // Predicated region
    $region26: #{tpu_custom_call.1} parent=1 // pred_check
      _
    $region27: #{tpu_custom_call.1} parent=1 // pred_check_branch
      %51 = sbr.rel (0) target = $region29
    $region28: #{tpu_custom_call.1} parent=1 // pred_region
      %52 = dma.done [#allocation6], 128
    $region29: #{tpu_custom_call.1} parent=1 // pred_fallthru
      _
    %p53 = scmp.eq.s32.totalorder 0, 0
    // Predicated region
    $region30: #{tpu_custom_call.1} parent=1 // pred_check
      %p54 = pneg %p53
    $region31: #{tpu_custom_call.1} parent=1 // pred_check_branch
      %56 = sbr.rel (%p54) target = $region33
    $region32: #{tpu_custom_call.1} parent=1 // pred_region
      %57 = vst [vmem:[#allocation8] sm:$0x1] 0.0
    $region33: #{tpu_custom_call.1} parent=1 // pred_fallthru
      _
    %v58 = vld [vmem:[#allocation2] sm:$0xff]
    %v59 = vld [vmem:[%s3] sm:$0xff]
    %v60 = vsub.f32 %v58, %v59
    %v61 = vld [vmem:[#allocation7] sm:$0xff]
    %v62 = vld [vmem:[#allocation5] sm:$0xff]
    %v63 = vmul.f32 %v61, %v62
    %v64 = vadd.f32 %v60, %v63
    %v65 = vld [vmem:[#allocation8] sm:$0x1]
    %v66 = vmul.f32 %v64, %v64
    %v67 = vrot.slane %v66, 4
    %v68 = vadd.f32 %v66, %v67
    %v69 = vrot.slane %v68, 2
    %v70 = vadd.f32 %v68, %v69
    %v71 = vrot.slane %v70, 1
    %v72 = vadd.f32 %v70, %v71
    %v73 = vadd.f32 %v65, %v72
    %74 = vst [vmem:[#allocation8] sm:$0x1] %v73
    // Predicated region
    $region34: #{tpu_custom_call.1} parent=1 // pred_check
      %p75 = pneg %p53
    $region35: #{tpu_custom_call.1} parent=1 // pred_check_branch
      %77 = sbr.rel (%p75) target = $region37
    $region36: #{tpu_custom_call.1} parent=1 // pred_region
      %v78 = vld [vmem:[#allocation8] sm:$0x1]
      %v79 = vmul.f32 %v78, 0.001
      %80 = vst [vmem:[#allocation8] sm:$0x1] %v79
    $region37: #{tpu_custom_call.1} parent=1 // pred_fallthru
      _
    // Predicated region
    $region38: #{tpu_custom_call.1} parent=1 // pred_check
      _
    $region39: #{tpu_custom_call.1} parent=1 // pred_check_branch
      %82 = sbr.rel (0) target = $region41
    $region40: #{tpu_custom_call.1} parent=1 // pred_region
      %s84 = ssub.s32 16, 16
      %85 = vsyncadd [#allocation4], %s84
      %s87 = sshll.u32 [#allocation8], 4
      %s88 = int_to_ptr.vmem [resolvable:$true] %s87
      %90 = dma.vmem_to_hbm [thread:$0]  %s88, 16, %s4, [#allocation4]
    $region41: #{tpu_custom_call.1} parent=1 // pred_fallthru
      _
    // Predicated region
    $region42: #{tpu_custom_call.1} parent=1 // pred_check
      _
    $region43: #{tpu_custom_call.1} parent=1 // pred_check_branch
      %92 = sbr.rel (0) target = $region45
    $region44: #{tpu_custom_call.1} parent=1 // pred_region
      %93 = dma.done [#allocation4], 16
    $region45: #{tpu_custom_call.1} parent=1 // pred_fallthru
      _
    %94 = vsyncpa [#allocation3], 1
    %95 = vsyncpa [#allocation6], 1
    %96 = vsyncpa [#allocation4], 1

</llo_original>
